<compile_context>
chip_gen: v7x
topology: tpu7x:2x2x1
jax: 0.10.0
libtpu: 0.0.40
codegen_flags: <defaults>
</compile_context>

<pallas_src>
import jax
import jax.numpy as jnp
from jax.experimental import pallas as pl
from jax.experimental.pallas import tpu as pltpu

EPS = 1e-5  # torch.nn.LayerNorm default


def _round_up(x, m):
    return ((x + m - 1) // m) * m


def prenorm_linear_kernel(x_ref, gamma_ref, beta_ref, w_ref, bias_ref, o_ref, xn_ref):
    """One (row_tile, h_tile) output block.

    LayerNorm statistics + affine run in f32 on the VPU/XLU/EUP only for the
    first H block (j == 0); the normalized tile is cached in VMEM scratch in
    the matmul dtype and reused for every other j block of the same row tile.
    """
    @pl.when(pl.program_id(1) == 0)
    def _():
        x = x_ref[...].astype(jnp.float32)                        # (TM, D)
        mean = jnp.mean(x, axis=-1, keepdims=True)
        centered = x - mean
        var = jnp.mean(centered * centered, axis=-1, keepdims=True)
        xn = centered * jax.lax.rsqrt(var + EPS)
        xn = xn * gamma_ref[...].astype(jnp.float32) + beta_ref[...].astype(jnp.float32)
        xn_ref[...] = xn.astype(xn_ref.dtype)

    # MXU matmul with f32 accumulation over the cached normalized activations.
    y = jnp.dot(xn_ref[...], w_ref[...], preferred_element_type=jnp.float32)  # (TM, TH)
    y = y + bias_ref[...].astype(jnp.float32)
    o_ref[...] = y.astype(o_ref.dtype)


def prenorm_linear(x, gamma, beta, w, bias, *, row_tile=None, h_tile=None,
                   matmul_dtype=jnp.bfloat16, out_dtype=None):
    """PreNorm with fn = Linear:  y = LayerNorm(x) @ W + b.

    x: (B, S, D); gamma/beta: (D,); w: (D, H); bias: (H,). Returns (B, S, H).
    Set matmul_dtype=jnp.float32 for full-precision (torch-exact) matmuls;
    set out_dtype=jnp.bfloat16 to halve output HBM writeback.
    """
    B, S, D = x.shape
    H = w.shape[1]
    rows = B * S
    out_dtype = x.dtype if out_dtype is None else jnp.dtype(out_dtype)
    mat_dtype = jnp.dtype(w.dtype if matmul_dtype is None else matmul_dtype)

    x_bytes = x.dtype.itemsize
    out_bytes = out_dtype.itemsize
    w_bytes = mat_dtype.itemsize

    # ---- generation-aware VMEM budget --------------------------------------
    # ~72% of physical VMEM: ~92 MiB on v5e/v6e (128 MiB), ~46 MiB on v7x (64 MiB/TC).
    try:
        phys_vmem = int(pltpu.get_tpu_info().vmem_capacity_bytes)
    except Exception:
        phys_vmem = 64 * 1024 * 1024
    budget = int(phys_vmem * 0.72)

    def _vmem_bytes(tm, th):
        return (2 * tm * D * x_bytes            # x row tile (double buffered)
                + tm * D * w_bytes              # cached normalized tile (scratch)
                + 2 * tm * th * out_bytes       # output tile (double buffered)
                + 2 * D * th * w_bytes          # weight tile (double buffered)
                + 2 * 4 * (2 * D + th)          # gamma / beta / bias (f32, 2 buffers)
                + 3 * tm * D * 4                # f32 LN temporaries (x, centered, xn)
                + tm * th * 4)                  # f32 matmul result before output cast

    # ---- tile sizing --------------------------------------------------------
    rows_pad = _round_up(rows, 128)
    H_pad = _round_up(H, 128)

    if row_tile is not None:
        row_tile = min(_round_up(row_tile, 128), rows_pad)
        rows_pad = _round_up(rows, row_tile)
        cands = [row_tile]
    else:
        # Multiples of 128 that divide rows_pad -> no padding of x beyond the
        # 128-row lane/sublane granularity; prefer the largest tile <= 1024.
        cands = sorted({t for t in (rows_pad, rows_pad // 2, rows_pad // 4,
                                    1024, 768, 512, 384, 256, 128)
                        if 128 <= t <= min(rows_pad, 1024)
                        and t % 128 == 0 and rows_pad % t == 0},
                       reverse=True)

    if h_tile is None:
        # Prefer the whole (padded) weight resident in VMEM: W is then streamed
        # from HBM exactly once rather than once per row tile.
        if any(_vmem_bytes(t, H_pad) <= budget for t in cands):
            h_tile = H_pad
        else:
            # Keep >= 256 for the 256-wide MXU generations (v6e/v7x); 128 is
            # already optimal on v5e.
            h_tile = min(512, H_pad)
    else:
        h_tile = min(_round_up(h_tile, 128), H_pad)
    h_pad = _round_up(H, h_tile)

    row_tile = max((t for t in cands if _vmem_bytes(t, h_tile) <= budget),
                   default=cands[-1])

    n_i = rows_pad // row_tile
    n_j = h_pad // h_tile

    vmem_limit = int(min(max(_vmem_bytes(row_tile, h_tile) + (8 << 20), 32 << 20),
                         phys_vmem - (4 << 20)))

    # ---- operand prep -------------------------------------------------------
    x2 = x.reshape(rows, D)
    if rows_pad != rows:
        # Zero padded rows normalize to xn == 0 (0 * rsqrt(eps)); no NaN/Inf is
        # produced, and the padded output rows are sliced off below.  Do NOT
        # "fix" this into a masked path.
        x2 = jnp.pad(x2, ((0, rows_pad - rows), (0, 0)))
    gamma2 = gamma.reshape(1, D).astype(jnp.float32)
    beta2 = beta.reshape(1, D).astype(jnp.float32)
    w2 = w.astype(mat_dtype)
    bias2 = bias.reshape(1, H).astype(jnp.float32)
    if h_pad != H:
        w2 = jnp.pad(w2, ((0, 0), (0, h_pad - H)))
        bias2 = jnp.pad(bias2, ((0, 0), (0, h_pad - H)))

    out = pl.pallas_call(
        prenorm_linear_kernel,
        out_shape=jax.ShapeDtypeStruct((rows_pad, h_pad), out_dtype),
        grid_spec=pltpu.PrefetchScalarGridSpec(
            num_scalar_prefetch=0,
            grid=(n_i, n_j),
            in_specs=[
                pl.BlockSpec((row_tile, D), lambda i, j: (i, 0)),   # x rows (only i)
                pl.BlockSpec((1, D), lambda i, j: (0, 0)),          # gamma (constant)
                pl.BlockSpec((1, D), lambda i, j: (0, 0)),          # beta  (constant)
                pl.BlockSpec((D, h_tile), lambda i, j: (0, j)),     # weight (only j)
                pl.BlockSpec((1, h_tile), lambda i, j: (0, j)),     # bias   (only j)
            ],
            out_specs=pl.BlockSpec((row_tile, h_tile), lambda i, j: (i, j)),
            scratch_shapes=[pltpu.VMEM((row_tile, D), mat_dtype)],  # cached xn
        ),
        compiler_params=pltpu.CompilerParams(
            # j must be sequential so the xn cached at j == 0 is valid for
            # j > 0; i stays parallel so the two TensorCores on v7x split the
            # row tiles (no-op on single-TC v5e/v6e).
            dimension_semantics=("parallel", "arbitrary"),
            vmem_limit_bytes=vmem_limit,
        ),
    )(x2, gamma2, beta2, w2, bias2)

    if rows_pad != rows or h_pad != H:
        out = out[:rows, :H]
    return out.reshape(B, S, H)


def reference(x, gamma, beta, w, bias):
    x = x.astype(jnp.float32)
    mean = jnp.mean(x, axis=-1, keepdims=True)
    var = jnp.mean((x - mean) ** 2, axis=-1, keepdims=True)
    xn = (x - mean) / jnp.sqrt(var + EPS)
    xn = xn * gamma + beta
    return xn @ w + bias


if __name__ == "__main__":
    key = jax.random.PRNGKey(0)
    kx, kw, kb, kx2, kw2, kb2 = jax.random.split(key, 6)

    # Config 1: small PreNorm over a transformer token stream (full-W-resident,
    # n_j == 1 path).
    B, S, dim, fusion_factor, hidden = 2, 8, 128, 1, 128
    D = dim * fusion_factor
    x = jax.random.normal(kx, (B, S, D), dtype=jnp.float32)
    gamma = jnp.ones((D,), dtype=jnp.float32)   # torch LayerNorm default init
    beta = jnp.zeros((D,), dtype=jnp.float32)
    w = jax.random.normal(kw, (D, hidden), dtype=jnp.float32) * 0.05
    bias = jax.random.normal(kb, (hidden,), dtype=jnp.float32) * 0.05

    y = jax.block_until_ready(prenorm_linear(x, gamma, beta, w, bias))
    y_ref = reference(x, gamma, beta, w, bias)
    assert y.shape == (B, S, hidden)
    err = float(jnp.max(jnp.abs(y - y_ref)))
    # bf16 MXU inputs with f32 accumulation: ~1e-3 absolute error expected here.
    assert err < 2e-2, f"config1 mismatch vs reference: max abs err {err}"

    # Config 2: force n_j > 1 (h_tile < H) to exercise the cached-xn path where
    # LayerNorm runs only at j == 0 and is reused for the remaining H blocks.
    hidden2 = 384
    x2 = jax.random.normal(kx2, (B, S, D), dtype=jnp.float32)
    w2 = jax.random.normal(kw2, (D, hidden2), dtype=jnp.float32) * 0.05
    bias2 = jax.random.normal(kb2, (hidden2,), dtype=jnp.float32) * 0.05
    y2 = jax.block_until_ready(
        prenorm_linear(x2, gamma, beta, w2, bias2, h_tile=128))
    y2_ref = reference(x2, gamma, beta, w2, bias2)
    assert y2.shape == (B, S, hidden2)
    err2 = float(jnp.max(jnp.abs(y2 - y2_ref)))
    assert err2 < 2e-2, f"config2 mismatch vs reference: max abs err {err2}"

    print("KERNEL_OK")
</pallas_src>

<mosaic_0001>
module attributes {stable_mosaic.version = 11 : i64} {
  func.func @prenorm_linear_kernel(%arg0: i32, %arg1: i32, %arg2: memref<128x128xf32, #tpu.memory_space<vmem>>, %arg3: memref<1x128xf32, #tpu.memory_space<vmem>>, %arg4: memref<1x128xf32, #tpu.memory_space<vmem>>, %arg5: memref<128x128xbf16, #tpu.memory_space<vmem>>, %arg6: memref<1x128xf32, #tpu.memory_space<vmem>>, %arg7: memref<128x128xf32, #tpu.memory_space<vmem>>, %arg8: memref<128x128xbf16, #tpu.memory_space<vmem>>) attributes {dimension_semantics = [#tpu.dimension_semantics<parallel>, #tpu.dimension_semantics<arbitrary>], iteration_bounds = array<i64: 1, 1>, scalar_prefetch = 0 : i64, scratch_operands = 1 : i64, tpu.core_type = #tpu.core_type<tc>, window_params = [{transform_indices = @transform_0, window_bounds = array<i64: 128, 128>}, {pipeline_mode = #tpu.pipeline_mode<synchronous>, transform_indices = @transform_1, window_bounds = array<i64: 1, 128>}, {pipeline_mode = #tpu.pipeline_mode<synchronous>, transform_indices = @transform_2, window_bounds = array<i64: 1, 128>}, {transform_indices = @transform_3, window_bounds = array<i64: 128, 128>}, {transform_indices = @transform_4, window_bounds = array<i64: 1, 128>}, {transform_indices = @transform_5, window_bounds = array<i64: 128, 128>}]} {
    %c0_i32 = arith.constant 0 : i32
    %0 = arith.cmpi eq, %arg1, %c0_i32 : i32
    %1 = arith.extui %0 : i1 to i32
    %c0_i32_0 = arith.constant 0 : i32
    %2 = arith.cmpi ne, %1, %c0_i32_0 : i32
    scf.if %2 {
      %c0_8 = arith.constant 0 : index
      %c0_9 = arith.constant 0 : index
      %10 = vector.load %arg2[%c0_8, %c0_9] : memref<128x128xf32, #tpu.memory_space<vmem>>, vector<128x128xf32>
      %cst_10 = arith.constant dense<0.000000e+00> : vector<128xf32>
      %11 = vector.multi_reduction <add>, %10, %cst_10 [1] : vector<128x128xf32> to vector<128xf32>
      %12 = vector.shape_cast %11 : vector<128xf32> to vector<128x1xf32>
      %cst_11 = arith.constant 1.280000e+02 : f32
      %13 = vector.broadcast %cst_11 : f32 to vector<128x1xf32>
      %14 = arith.divf %12, %13 : vector<128x1xf32>
      %15 = vector.broadcast %14 : vector<128x1xf32> to vector<128x128xf32>
      %16 = arith.subf %10, %15 : vector<128x128xf32>
      %17 = arith.mulf %16, %16 : vector<128x128xf32>
      %cst_12 = arith.constant dense<0.000000e+00> : vector<128xf32>
      %18 = vector.multi_reduction <add>, %17, %cst_12 [1] : vector<128x128xf32> to vector<128xf32>
      %19 = vector.shape_cast %18 : vector<128xf32> to vector<128x1xf32>
      %cst_13 = arith.constant 1.280000e+02 : f32
      %20 = vector.broadcast %cst_13 : f32 to vector<128x1xf32>
      %21 = arith.divf %19, %20 : vector<128x1xf32>
      %cst_14 = arith.constant 9.99999974E-6 : f32
      %22 = vector.broadcast %cst_14 : f32 to vector<128x1xf32>
      %23 = arith.addf %21, %22 : vector<128x1xf32>
      %24 = math.rsqrt %23 : vector<128x1xf32>
      %25 = vector.broadcast %24 : vector<128x1xf32> to vector<128x128xf32>
      %26 = arith.mulf %16, %25 : vector<128x128xf32>
      %c0_15 = arith.constant 0 : index
      %c0_16 = arith.constant 0 : index
      %27 = vector.load %arg3[%c0_15, %c0_16] : memref<1x128xf32, #tpu.memory_space<vmem>>, vector<1x128xf32>
      %28 = vector.broadcast %27 : vector<1x128xf32> to vector<128x128xf32>
      %29 = arith.mulf %26, %28 : vector<128x128xf32>
      %c0_17 = arith.constant 0 : index
      %c0_18 = arith.constant 0 : index
      %30 = vector.load %arg4[%c0_17, %c0_18] : memref<1x128xf32, #tpu.memory_space<vmem>>, vector<1x128xf32>
      %31 = vector.broadcast %30 : vector<1x128xf32> to vector<128x128xf32>
      %32 = arith.addf %29, %31 : vector<128x128xf32>
      %33 = arith.truncf %32 : vector<128x128xf32> to vector<128x128xbf16>
      %c0_19 = arith.constant 0 : index
      %c0_20 = arith.constant 0 : index
      %34 = vector.load %arg8[%c0_19, %c0_20] : memref<128x128xbf16, #tpu.memory_space<vmem>>, vector<128x128xbf16>
      tpu.vector_store %arg8[%c0_19, %c0_20], %33 {strides = array<i32>} : memref<128x128xbf16, #tpu.memory_space<vmem>>, vector<128x128xbf16>,
    } else {
    }
    %c0 = arith.constant 0 : index
    %c0_1 = arith.constant 0 : index
    %3 = vector.load %arg8[%c0, %c0_1] : memref<128x128xbf16, #tpu.memory_space<vmem>>, vector<128x128xbf16>
    %c0_2 = arith.constant 0 : index
    %c0_3 = arith.constant 0 : index
    %4 = vector.load %arg5[%c0_2, %c0_3] : memref<128x128xbf16, #tpu.memory_space<vmem>>, vector<128x128xbf16>
    %cst = arith.constant dense<0.000000e+00> : vector<128x128xf32>
    %5 = tpu.matmul %3, %4, %cst {dimension_numbers = #tpu.dot_dimension_numbers<[1], [0], [0], [1], [0, 0, 1, 1], [], []>} : vector<128x128xbf16>, vector<128x128xbf16>, vector<128x128xf32> -> vector<128x128xf32>
    %c0_4 = arith.constant 0 : index
    %c0_5 = arith.constant 0 : index
    %6 = vector.load %arg6[%c0_4, %c0_5] : memref<1x128xf32, #tpu.memory_space<vmem>>, vector<1x128xf32>
    %7 = vector.broadcast %6 : vector<1x128xf32> to vector<128x128xf32>
    %8 = arith.addf %5, %7 : vector<128x128xf32>
    %c0_6 = arith.constant 0 : index
    %c0_7 = arith.constant 0 : index
    %9 = vector.load %arg7[%c0_6, %c0_7] : memref<128x128xf32, #tpu.memory_space<vmem>>, vector<128x128xf32>
    tpu.vector_store %arg7[%c0_6, %c0_7], %8 {strides = array<i32>} : memref<128x128xf32, #tpu.memory_space<vmem>>, vector<128x128xf32>,
    return
  }
  func.func @transform_0(%arg0: i32, %arg1: i32) -> (i32, i32) {
    %c0_i32 = arith.constant 0 : i32
    %c0_i32_0 = arith.constant 0 : i32
    return %arg0, %c0_i32 : i32, i32
  }
  func.func @transform_1(%arg0: i32, %arg1: i32) -> (i32, i32) {
    %c0_i32 = arith.constant 0 : i32
    %c0_i32_0 = arith.constant 0 : i32
    %c0_i32_1 = arith.constant 0 : i32
    return %c0_i32, %c0_i32_0 : i32, i32
  }
  func.func @transform_2(%arg0: i32, %arg1: i32) -> (i32, i32) {
    %c0_i32 = arith.constant 0 : i32
    %c0_i32_0 = arith.constant 0 : i32
    %c0_i32_1 = arith.constant 0 : i32
    return %c0_i32, %c0_i32_0 : i32, i32
  }
  func.func @transform_3(%arg0: i32, %arg1: i32) -> (i32, i32) {
    %c0_i32 = arith.constant 0 : i32
    %c0_i32_0 = arith.constant 0 : i32
    return %c0_i32, %arg1 : i32, i32
  }
  func.func @transform_4(%arg0: i32, %arg1: i32) -> (i32, i32) {
    %c0_i32 = arith.constant 0 : i32
    %c0_i32_0 = arith.constant 0 : i32
    return %c0_i32, %arg1 : i32, i32
  }
  func.func @transform_5(%arg0: i32, %arg1: i32) -> (i32, i32) {
    %c0_i32 = arith.constant 0 : i32
    return %arg0, %arg1 : i32, i32
  }
}

</mosaic_0001>

<llo_original>
// kernel: tpu_custom_call.1
$region0: #{tpu_custom_call.1}
  #allocation0 [shape = 'u32[]', space=smem, size = 0x4, offset = 0x4, fixed_abs, tag = 'smem constant byte address 0x4 - core index']
  #allocation1 [shape = 'u32[144,128]{1,0:T(1,128)}', space=vmem, size = 0x12000, scoped, tag = 'internal scratch']
  #allocation2 [shape = 'bf16[128,128]{1,0:T(16,128)(2,1)}', space=vmem, size = 0x8000, scoped, tag = 'scratch operand']
  %s0 = inlined_call_operand.hbm [shape: f32[128,128], index: 0, kind: input, shape index: {}]
  %s1 = inlined_call_operand.vmem [shape: f32[1,128], index: 1, kind: input, shape index: {}]
  %s2 = inlined_call_operand.vmem [shape: f32[1,128], index: 2, kind: input, shape index: {}]
  %s3 = inlined_call_operand.hbm [shape: bf16[128,128], index: 3, kind: input, shape index: {}]
  %s4 = inlined_call_operand.vmem [shape: f32[1,128], index: 4, kind: input, shape index: {}]
  %s5 = inlined_call_operand.hbm [shape: f32[128,128], index: 5, kind: output, shape index: {}]
  %s6 = sld [smem:[#allocation0]]
  $region42: #{tpu_custom_call.1} parent=0
    _
  %s8 = ssub.s32 1, %s6
  %s9 = scalar_select 0, %s8, %s6
  $region1: #{tpu_custom_call.1} parent=0
    #allocation3 [shape = 'u8[65536]{0}', space=vmem, size = 0x10000, scoped, tag = 'input window, operand 0, single buffered']
    #allocation4 [shape = 's32[1]{0}', space=sflag, size = 0x4, scoped, tag = 'scoped memory for tpu_custom_call.1']
    #allocation5 [shape = 's32[1]{0}', space=sflag, size = 0x4, scoped, tag = 'scoped memory for tpu_custom_call.1']
    #allocation6 [shape = 'u8[32768]{0}', space=vmem, size = 0x8000, scoped, tag = 'input window, operand 3, single buffered']
    #allocation7 [shape = 's32[1]{0}', space=sflag, size = 0x4, scoped, tag = 'scoped memory for tpu_custom_call.1']
    #allocation8 [shape = 'u8[65536]{0}', space=vmem, size = 0x10000, scoped, tag = 'output window, operand 0, single buffered']
    %10 = vsyncpa [#allocation4], 0
    %11 = vsyncpa [#allocation7], 0
    %12 = vsyncpa [#allocation5], 0
    // Predicated region
    $region2: #{tpu_custom_call.1} parent=1 // pred_check
      _
    $region3: #{tpu_custom_call.1} parent=1 // pred_check_branch
      %14 = sbr.rel (0) target = $region5
    $region4: #{tpu_custom_call.1} parent=1 // pred_region
      %s16 = ssub.s32 2048, 2048
      %17 = vsyncadd [#allocation4], %s16
      %s18 = sshll.u32 [#allocation3], 4
      %s19 = int_to_ptr.vmem [resolvable:$true] %s18
      %24 = dma.hbm_to_vmem [thread:$0]  %s0, 2048, %s19, [#allocation4], 128, 128, 8
    $region5: #{tpu_custom_call.1} parent=1 // pred_fallthru
      _
    // Predicated region
    $region6: #{tpu_custom_call.1} parent=1 // pred_check
      _
    $region7: #{tpu_custom_call.1} parent=1 // pred_check_branch
      %26 = sbr.rel (0) target = $region9
    $region8: #{tpu_custom_call.1} parent=1 // pred_region
      _
    $region9: #{tpu_custom_call.1} parent=1 // pred_fallthru
      _
    // Predicated region
    $region10: #{tpu_custom_call.1} parent=1 // pred_check
      _
    $region11: #{tpu_custom_call.1} parent=1 // pred_check_branch
      %28 = sbr.rel (0) target = $region13
    $region12: #{tpu_custom_call.1} parent=1 // pred_region
      _
    $region13: #{tpu_custom_call.1} parent=1 // pred_fallthru
      _
    // Predicated region
    $region14: #{tpu_custom_call.1} parent=1 // pred_check
      _
    $region15: #{tpu_custom_call.1} parent=1 // pred_check_branch
      %30 = sbr.rel (0) target = $region17
    $region16: #{tpu_custom_call.1} parent=1 // pred_region
      %s32 = ssub.s32 1024, 1024
      %33 = vsyncadd [#allocation7], %s32
      %s34 = sshll.u32 [#allocation6], 4
      %s35 = int_to_ptr.vmem [resolvable:$true] %s34
      %40 = dma.hbm_to_vmem [thread:$0]  %s3, 1024, %s35, [#allocation7], 64, 64, 4
    $region17: #{tpu_custom_call.1} parent=1 // pred_fallthru
      _
    // Predicated region
    $region18: #{tpu_custom_call.1} parent=1 // pred_check
      _
    $region19: #{tpu_custom_call.1} parent=1 // pred_check_branch
      %42 = sbr.rel (0) target = $region21
    $region20: #{tpu_custom_call.1} parent=1 // pred_region
      _
    $region21: #{tpu_custom_call.1} parent=1 // pred_fallthru
      _
    // Predicated region
    $region22: #{tpu_custom_call.1} parent=1 // pred_check
      _
    $region23: #{tpu_custom_call.1} parent=1 // pred_check_branch
      %44 = sbr.rel (0) target = $region25
    $region24: #{tpu_custom_call.1} parent=1 // pred_region
      %45 = dma.done [#allocation4], 2048
    $region25: #{tpu_custom_call.1} parent=1 // pred_fallthru
      _
    // Predicated region
    $region26: #{tpu_custom_call.1} parent=1 // pred_check
      _
    $region27: #{tpu_custom_call.1} parent=1 // pred_check_branch
      %47 = sbr.rel (0) target = $region29
    $region28: #{tpu_custom_call.1} parent=1 // pred_region
      %48 = dma.done [#allocation7], 1024
    $region29: #{tpu_custom_call.1} parent=1 // pred_fallthru
      _
    %p50 = scmp.eq.s32.totalorder 0, 0
    // Predicated region
    $region30: #{tpu_custom_call.1} parent=1 // pred_check
      %p51 = pneg %p50
    $region31: #{tpu_custom_call.1} parent=1 // pred_check_branch
      %53 = sbr.rel (%p51) target = $region33
    $region32: #{tpu_custom_call.1} parent=1 // pred_region
      %v54 = vld [vmem:[#allocation3] sm:$0xff]
      %v55 = vld [vmem:[#allocation3 + $0x8] sm:$0xff]
      %v56 = vld [vmem:[#allocation3 + $0x10] sm:$0xff]
      %v57 = vld [vmem:[#allocation3 + $0x18] sm:$0xff]
      %v58 = vld [vmem:[#allocation3 + $0x20] sm:$0xff]
      %v59 = vld [vmem:[#allocation3 + $0x28] sm:$0xff]
      %v60 = vld [vmem:[#allocation3 + $0x30] sm:$0xff]
      %v61 = vld [vmem:[#allocation3 + $0x38] sm:$0xff]
      %v62 = vld [vmem:[#allocation3 + $0x40] sm:$0xff]
      %v63 = vld [vmem:[#allocation3 + $0x48] sm:$0xff]
      %v64 = vld [vmem:[#allocation3 + $0x50] sm:$0xff]
      %v65 = vld [vmem:[#allocation3 + $0x58] sm:$0xff]
      %v66 = vld [vmem:[#allocation3 + $0x60] sm:$0xff]
      %v67 = vld [vmem:[#allocation3 + $0x68] sm:$0xff]
      %v68 = vld [vmem:[#allocation3 + $0x70] sm:$0xff]
      %v69 = vld [vmem:[#allocation3 + $0x78] sm:$0xff]
      %70 = vadd.xlane.f32.xlu0 %v54
      %v71 = vpop.xlane.xlu0 %70
      %72 = vadd.xlane.f32.xlu0 %v55
      %v73 = vpop.xlane.xlu0 %72
      %74 = vadd.xlane.f32.xlu0 %v56
      %v75 = vpop.xlane.xlu0 %74
      %76 = vadd.xlane.f32.xlu0 %v57
      %v77 = vpop.xlane.xlu0 %76
      %78 = vadd.xlane.f32.xlu0 %v58
      %v79 = vpop.xlane.xlu0 %78
      %80 = vadd.xlane.f32.xlu0 %v59
      %v81 = vpop.xlane.xlu0 %80
      %82 = vadd.xlane.f32.xlu0 %v60
      %v83 = vpop.xlane.xlu0 %82
      %84 = vadd.xlane.f32.xlu0 %v61
      %v85 = vpop.xlane.xlu0 %84
      %86 = vadd.xlane.f32.xlu0 %v62
      %v87 = vpop.xlane.xlu0 %86
      %88 = vadd.xlane.f32.xlu0 %v63
      %v89 = vpop.xlane.xlu0 %88
      %90 = vadd.xlane.f32.xlu0 %v64
      %v91 = vpop.xlane.xlu0 %90
      %92 = vadd.xlane.f32.xlu0 %v65
      %v93 = vpop.xlane.xlu0 %92
      %94 = vadd.xlane.f32.xlu0 %v66
      %v95 = vpop.xlane.xlu0 %94
      %96 = vadd.xlane.f32.xlu0 %v67
      %v97 = vpop.xlane.xlu0 %96
      %98 = vadd.xlane.f32.xlu0 %v68
      %v99 = vpop.xlane.xlu0 %98
      %100 = vadd.xlane.f32.xlu0 %v69
      %v101 = vpop.xlane.xlu0 %100
      %v102 = vrcp.pop 128.0
      %v103 = vmul.f32 %v71, %v102
      %v104 = vmul.f32 %v73, %v102
      %v105 = vmul.f32 %v75, %v102
      %v106 = vmul.f32 %v77, %v102
      %v107 = vmul.f32 %v79, %v102
      %v108 = vmul.f32 %v81, %v102
      %v109 = vmul.f32 %v83, %v102
      %v110 = vmul.f32 %v85, %v102
      %v111 = vmul.f32 %v87, %v102
      %v112 = vmul.f32 %v89, %v102
      %v113 = vmul.f32 %v91, %v102
      %v114 = vmul.f32 %v93, %v102
      %v115 = vmul.f32 %v95, %v102
      %v116 = vmul.f32 %v97, %v102
      %v117 = vmul.f32 %v99, %v102
      %v118 = vmul.f32 %v101, %v102
      %v119 = vsub.f32 %v54, %v103
      %v120 = vsub.f32 %v55, %v104
      %v121 = vsub.f32 %v56, %v105
      %v122 = vsub.f32 %v57, %v106
      %v123 = vsub.f32 %v58, %v107
      %v124 = vsub.f32 %v59, %v108
      %v125 = vsub.f32 %v60, %v109
      %v126 = vsub.f32 %v61, %v110
      %v127 = vsub.f32 %v62, %v111
      %v128 = vsub.f32 %v63, %v112
      %v129 = vsub.f32 %v64, %v113
      %v130 = vsub.f32 %v65, %v114
      %v131 = vsub.f32 %v66, %v115
      %v132 = vsub.f32 %v67, %v116
      %v133 = vsub.f32 %v68, %v117
      %v134 = vsub.f32 %v69, %v118
      %v135 = vmul.f32 %v119, %v119
      %v136 = vmul.f32 %v120, %v120
      %v137 = vmul.f32 %v121, %v121
      %v138 = vmul.f32 %v122, %v122
      %v139 = vmul.f32 %v123, %v123
      %v140 = vmul.f32 %v124, %v124
      %v141 = vmul.f32 %v125, %v125
      %v142 = vmul.f32 %v126, %v126
      %v143 = vmul.f32 %v127, %v127
      %v144 = vmul.f32 %v128, %v128
      %v145 = vmul.f32 %v129, %v129
      %v146 = vmul.f32 %v130, %v130
      %v147 = vmul.f32 %v131, %v131
      %v148 = vmul.f32 %v132, %v132
      %v149 = vmul.f32 %v133, %v133
      %v150 = vmul.f32 %v134, %v134
      %151 = vadd.xlane.f32.xlu0 %v135
      %v152 = vpop.xlane.xlu0 %151
      %153 = vadd.xlane.f32.xlu0 %v136
      %v154 = vpop.xlane.xlu0 %153
      %155 = vadd.xlane.f32.xlu0 %v137
      %v156 = vpop.xlane.xlu0 %155
      %157 = vadd.xlane.f32.xlu0 %v138
      %v158 = vpop.xlane.xlu0 %157
      %159 = vadd.xlane.f32.xlu0 %v139
      %v160 = vpop.xlane.xlu0 %159
      %161 = vadd.xlane.f32.xlu0 %v140
      %v162 = vpop.xlane.xlu0 %161
      %163 = vadd.xlane.f32.xlu0 %v141
      %v164 = vpop.xlane.xlu0 %163
      %165 = vadd.xlane.f32.xlu0 %v142
      %v166 = vpop.xlane.xlu0 %165
      %167 = vadd.xlane.f32.xlu0 %v143
      %v168 = vpop.xlane.xlu0 %167
      %169 = vadd.xlane.f32.xlu0 %v144
      %v170 = vpop.xlane.xlu0 %169
      %171 = vadd.xlane.f32.xlu0 %v145
      %v172 = vpop.xlane.xlu0 %171
      %173 = vadd.xlane.f32.xlu0 %v146
      %v174 = vpop.xlane.xlu0 %173
      %175 = vadd.xlane.f32.xlu0 %v147
      %v176 = vpop.xlane.xlu0 %175
      %177 = vadd.xlane.f32.xlu0 %v148
      %v178 = vpop.xlane.xlu0 %177
      %179 = vadd.xlane.f32.xlu0 %v149
      %v180 = vpop.xlane.xlu0 %179
      %181 = vadd.xlane.f32.xlu0 %v150
      %v182 = vpop.xlane.xlu0 %181
      %v183 = vmul.f32 %v152, %v102
      %v184 = vmul.f32 %v154, %v102
      %v185 = vmul.f32 %v156, %v102
      %v186 = vmul.f32 %v158, %v102
      %v187 = vmul.f32 %v160, %v102
      %v188 = vmul.f32 %v162, %v102
      %v189 = vmul.f32 %v164, %v102
      %v190 = vmul.f32 %v166, %v102
      %v191 = vmul.f32 %v168, %v102
      %v192 = vmul.f32 %v170, %v102
      %v193 = vmul.f32 %v172, %v102
      %v194 = vmul.f32 %v174, %v102
      %v195 = vmul.f32 %v176, %v102
      %v196 = vmul.f32 %v178, %v102
      %v197 = vmul.f32 %v180, %v102
      %v198 = vmul.f32 %v182, %v102
      %v199 = vadd.f32 %v183, 1e-05
      %v200 = vadd.f32 %v184, 1e-05
      %v201 = vadd.f32 %v185, 1e-05
      %v202 = vadd.f32 %v186, 1e-05
      %v203 = vadd.f32 %v187, 1e-05
      %v204 = vadd.f32 %v188, 1e-05
      %v205 = vadd.f32 %v189, 1e-05
      %v206 = vadd.f32 %v190, 1e-05
      %v207 = vadd.f32 %v191, 1e-05
      %v208 = vadd.f32 %v192, 1e-05
      %v209 = vadd.f32 %v193, 1e-05
      %v210 = vadd.f32 %v194, 1e-05
      %v211 = vadd.f32 %v195, 1e-05
      %v212 = vadd.f32 %v196, 1e-05
      %v213 = vadd.f32 %v197, 1e-05
      %v214 = vadd.f32 %v198, 1e-05
      %v215 = vrsqrt.pop %v199
      %v216 = vrsqrt.pop %v200
      %v217 = vrsqrt.pop %v201
      %v218 = vrsqrt.pop %v202
      %v219 = vrsqrt.pop %v203
      %v220 = vrsqrt.pop %v204
      %v221 = vrsqrt.pop %v205
      %v222 = vrsqrt.pop %v206
      %v223 = vrsqrt.pop %v207
      %v224 = vrsqrt.pop %v208
      %v225 = vrsqrt.pop %v209
      %v226 = vrsqrt.pop %v210
      %v227 = vrsqrt.pop %v211
      %v228 = vrsqrt.pop %v212
      %v229 = vrsqrt.pop %v213
      %v230 = vrsqrt.pop %v214
      %v231 = vmul.f32 %v119, %v215
      %v232 = vmul.f32 %v120, %v216
      %v233 = vmul.f32 %v121, %v217
      %v234 = vmul.f32 %v122, %v218
      %v235 = vmul.f32 %v123, %v219
      %v236 = vmul.f32 %v124, %v220
      %v237 = vmul.f32 %v125, %v221
      %v238 = vmul.f32 %v126, %v222
      %v239 = vmul.f32 %v127, %v223
      %v240 = vmul.f32 %v128, %v224
      %v241 = vmul.f32 %v129, %v225
      %v242 = vmul.f32 %v130, %v226
      %v243 = vmul.f32 %v131, %v227
      %v244 = vmul.f32 %v132, %v228
      %v245 = vmul.f32 %v133, %v229
      %v246 = vmul.f32 %v134, %v230
      %v247 = vld [vmem:[%s1] sm:$0x1]
      %v249 = vlaneseq
      %v250 = vshrl.u32 %v249, 7
      %v251 = vsub.s32 0, %v250
      %v252 = vrot.slane %v247, %v251
      %v254 = vmul.f32 %v231, %v252
      %v255 = vmul.f32 %v232, %v252
      %v256 = vmul.f32 %v233, %v252
      %v257 = vmul.f32 %v234, %v252
      %v258 = vmul.f32 %v235, %v252
      %v259 = vmul.f32 %v236, %v252
      %v260 = vmul.f32 %v237, %v252
      %v261 = vmul.f32 %v238, %v252
      %v262 = vmul.f32 %v239, %v252
      %v263 = vmul.f32 %v240, %v252
      %v264 = vmul.f32 %v241, %v252
      %v265 = vmul.f32 %v242, %v252
      %v266 = vmul.f32 %v243, %v252
      %v267 = vmul.f32 %v244, %v252
      %v268 = vmul.f32 %v245, %v252
      %v269 = vmul.f32 %v246, %v252
      %v270 = vld [vmem:[%s2] sm:$0x1]
      %v272 = vlaneseq
      %v273 = vshrl.u32 %v272, 7
      %v274 = vsub.s32 0, %v273
      %v275 = vrot.slane %v270, %v274
      %v277 = vadd.f32 %v254, %v275
      %v278 = vadd.f32 %v255, %v275
      %v279 = vadd.f32 %v256, %v275
      %v280 = vadd.f32 %v257, %v275
      %v281 = vadd.f32 %v258, %v275
      %v282 = vadd.f32 %v259, %v275
      %v283 = vadd.f32 %v260, %v275
      %v284 = vadd.f32 %v261, %v275
      %v285 = vadd.f32 %v262, %v275
      %v286 = vadd.f32 %v263, %v275
      %v287 = vadd.f32 %v264, %v275
      %v288 = vadd.f32 %v265, %v275
      %v289 = vadd.f32 %v266, %v275
      %v290 = vadd.f32 %v267, %v275
      %v291 = vadd.f32 %v268, %v275
      %v292 = vadd.f32 %v269, %v275
      %v293 = vpack.c.bf16 %v278, %v277
      %v294 = vpack.c.bf16 %v280, %v279
      %v295 = vpack.c.bf16 %v282, %v281
      %v296 = vpack.c.bf16 %v284, %v283
      %v297 = vpack.c.bf16 %v286, %v285
      %v298 = vpack.c.bf16 %v288, %v287
      %v299 = vpack.c.bf16 %v290, %v289
      %v300 = vpack.c.bf16 %v292, %v291
      %301 = vst [vmem:[#allocation2] sm:$0xff] %v293
      %302 = vst [vmem:[#allocation2 + $0x8] sm:$0xff] %v294
      %303 = vst [vmem:[#allocation2 + $0x10] sm:$0xff] %v295
      %304 = vst [vmem:[#allocation2 + $0x18] sm:$0xff] %v296
      %305 = vst [vmem:[#allocation2 + $0x20] sm:$0xff] %v297
      %306 = vst [vmem:[#allocation2 + $0x28] sm:$0xff] %v298
      %307 = vst [vmem:[#allocation2 + $0x30] sm:$0xff] %v299
      %308 = vst [vmem:[#allocation2 + $0x38] sm:$0xff] %v300
    $region33: #{tpu_custom_call.1} parent=1 // pred_fallthru
      _
    %v309 = vld [vmem:[#allocation2] sm:$0xff]
    %v310 = vld [vmem:[#allocation2 + $0x8] sm:$0xff]
    %v311 = vld [vmem:[#allocation2 + $0x10] sm:$0xff]
    %v312 = vld [vmem:[#allocation2 + $0x18] sm:$0xff]
    %v313 = vld [vmem:[#allocation2 + $0x20] sm:$0xff]
    %v314 = vld [vmem:[#allocation2 + $0x28] sm:$0xff]
    %v315 = vld [vmem:[#allocation2 + $0x30] sm:$0xff]
    %v316 = vld [vmem:[#allocation2 + $0x38] sm:$0xff]
    %v317 = vld [vmem:[#allocation6] sm:$0xf]
    %v318 = vld [vmem:[#allocation6 + $0x4] sm:$0xf]
    %v319 = vld [vmem:[#allocation6 + $0x8] sm:$0xf]
    %v320 = vld [vmem:[#allocation6 + $0xc] sm:$0xf]
    %v321 = vld [vmem:[#allocation6 + $0x10] sm:$0xf]
    %v322 = vld [vmem:[#allocation6 + $0x14] sm:$0xf]
    %v323 = vld [vmem:[#allocation6 + $0x18] sm:$0xf]
    %v324 = vld [vmem:[#allocation6 + $0x1c] sm:$0xf]
    %v325 = vld [vmem:[#allocation6 + $0x20] sm:$0xf]
    %v326 = vld [vmem:[#allocation6 + $0x24] sm:$0xf]
    %v327 = vld [vmem:[#allocation6 + $0x28] sm:$0xf]
    %v328 = vld [vmem:[#allocation6 + $0x2c] sm:$0xf]
    %v329 = vld [vmem:[#allocation6 + $0x30] sm:$0xf]
    %v330 = vld [vmem:[#allocation6 + $0x34] sm:$0xf]
    %v331 = vld [vmem:[#allocation6 + $0x38] sm:$0xf]
    %v332 = vld [vmem:[#allocation6 + $0x3c] sm:$0xf]
    %v333 = vld [vmem:[%s4] sm:$0x1]
    %v335 = vlaneseq
    %v336 = vshrl.u32 %v335, 7
    %v337 = vsub.s32 0, %v336
    %v338 = vrot.slane %v333, %v337
    %v356 = vunpack.c.l.b16 %v317
    %v357 = vunpack.c.l.b16 %v318
    %v358 = vunpack.c.l.b16 %v319
    %v359 = vunpack.c.l.b16 %v320
    %v360 = vunpack.c.l.b16 %v321
    %v361 = vunpack.c.l.b16 %v322
    %v362 = vunpack.c.l.b16 %v323
    %v363 = vunpack.c.l.b16 %v324
    %v364 = vunpack.c.l.b16 %v325
    %v365 = vunpack.c.l.b16 %v326
    %v366 = vunpack.c.l.b16 %v327
    %v367 = vunpack.c.l.b16 %v328
    %v368 = vunpack.c.l.b16 %v329
    %v369 = vunpack.c.l.b16 %v330
    %v370 = vunpack.c.l.b16 %v331
    %v371 = vunpack.c.l.b16 %v332
    %v372 = vpack.c.b16 %v357, %v356
    %v373 = vpack.c.b16 %v359, %v358
    %v374 = vpack.c.b16 %v361, %v360
    %v375 = vpack.c.b16 %v363, %v362
    %v376 = vpack.c.b16 %v365, %v364
    %v377 = vpack.c.b16 %v367, %v366
    %v378 = vpack.c.b16 %v369, %v368
    %v379 = vpack.c.b16 %v371, %v370
    %388 = vmatprep.subr.bf16.mxu0 0
    %389 = vmatpush1.bf16.msra.mxu0 %v372
    %390 = vmatprep.subr.bf16.mxu0 0
    %391 = vmatpush1.bf16.msra.mxu0 %v373
    %392 = vmatprep.subr.bf16.mxu0 0
    %393 = vmatpush1.bf16.msra.mxu0 %v374
    %394 = vmatprep.subr.bf16.mxu0 0
    %395 = vmatpush1.bf16.msra.mxu0 %v375
    %396 = vmatprep.subr.bf16.mxu0 0
    %397 = vmatpush1.bf16.msra.mxu0 %v376
    %398 = vmatprep.subr.bf16.mxu0 0
    %399 = vmatpush1.bf16.msra.mxu0 %v377
    %400 = vmatprep.subr.bf16.mxu0 0
    %401 = vmatpush1.bf16.msra.mxu0 %v378
    %402 = vmatprep.subr.bf16.mxu0 0
    %403 = vmatpush1.bf16.msra.mxu0 %v379
    %404 = vmatprep.subr.bf16.mxu0 0
    %405 = vmatpush1.bf16.msra.mxu0 0
    %406 = vmatprep.subr.bf16.mxu0 0
    %407 = vmatpush1.bf16.msra.mxu0 0
    %408 = vmatprep.subr.bf16.mxu0 0
    %409 = vmatpush1.bf16.msra.mxu0 0
    %410 = vmatprep.subr.bf16.mxu0 0
    %411 = vmatpush1.bf16.msra.mxu0 0
    %412 = vmatprep.subr.bf16.mxu0 0
    %413 = vmatpush1.bf16.msra.mxu0 0
    %414 = vmatprep.subr.bf16.mxu0 0
    %415 = vmatpush1.bf16.msra.mxu0 0
    %416 = vmatprep.subr.bf16.mxu0 0
    %417 = vmatpush1.bf16.msra.mxu0 0
    %418 = vmatprep.subr.bf16.mxu0 0
    %419 = vmatpush1.bf16.msra.mxu0 0
    %420 = vmatprep.mubr.bf16.mxu0 0
    %421 = vmatmul.mubr.bf16.gmra.mrb[0].mxu0 %v309
    %v422 = vpop.f32.mrb[0].mxu0
    %v423 = vadd.f32 %v338, %v422
    %v424 = vpop.f32.mrb[0].mxu0
    %v425 = vpop.f32.mrb[0].mxu0
    %v426 = vadd.f32 %v338, %v425
    %v427 = vpop.f32.mrb[0].mxu0
    %428 = vmatprep.mubr.bf16.mxu0 0
    %429 = vmatmul.mubr.bf16.gmra.mrb[0].mxu0 %v310
    %v430 = vpop.f32.mrb[0].mxu0
    %v431 = vadd.f32 %v338, %v430
    %v432 = vpop.f32.mrb[0].mxu0
    %v433 = vpop.f32.mrb[0].mxu0
    %v434 = vadd.f32 %v338, %v433
    %v435 = vpop.f32.mrb[0].mxu0
    %436 = vmatprep.mubr.bf16.mxu0 0
    %437 = vmatmul.mubr.bf16.gmra.mrb[0].mxu0 %v311
    %v438 = vpop.f32.mrb[0].mxu0
    %v439 = vadd.f32 %v338, %v438
    %v440 = vpop.f32.mrb[0].mxu0
    %v441 = vpop.f32.mrb[0].mxu0
    %v442 = vadd.f32 %v338, %v441
    %v443 = vpop.f32.mrb[0].mxu0
    %444 = vmatprep.mubr.bf16.mxu0 0
    %445 = vmatmul.mubr.bf16.gmra.mrb[0].mxu0 %v312
    %v446 = vpop.f32.mrb[0].mxu0
    %v447 = vadd.f32 %v338, %v446
    %v448 = vpop.f32.mrb[0].mxu0
    %v449 = vpop.f32.mrb[0].mxu0
    %v450 = vadd.f32 %v338, %v449
    %v451 = vpop.f32.mrb[0].mxu0
    %452 = vmatprep.mubr.bf16.mxu0 0
    %453 = vmatmul.mubr.bf16.gmra.mrb[0].mxu0 %v313
    %v454 = vpop.f32.mrb[0].mxu0
    %v455 = vadd.f32 %v338, %v454
    %v456 = vpop.f32.mrb[0].mxu0
    %v457 = vpop.f32.mrb[0].mxu0
    %v458 = vadd.f32 %v338, %v457
    %v459 = vpop.f32.mrb[0].mxu0
    %460 = vmatprep.mubr.bf16.mxu0 0
    %461 = vmatmul.mubr.bf16.gmra.mrb[0].mxu0 %v314
    %v462 = vpop.f32.mrb[0].mxu0
    %v463 = vadd.f32 %v338, %v462
    %v464 = vpop.f32.mrb[0].mxu0
    %v465 = vpop.f32.mrb[0].mxu0
    %v466 = vadd.f32 %v338, %v465
    %v467 = vpop.f32.mrb[0].mxu0
    %468 = vmatprep.mubr.bf16.mxu0 0
    %469 = vmatmul.mubr.bf16.gmra.mrb[0].mxu0 %v315
    %v470 = vpop.f32.mrb[0].mxu0
    %v471 = vadd.f32 %v338, %v470
    %v472 = vpop.f32.mrb[0].mxu0
    %v473 = vpop.f32.mrb[0].mxu0
    %v474 = vadd.f32 %v338, %v473
    %v475 = vpop.f32.mrb[0].mxu0
    %476 = vmatprep.mubr.bf16.mxu0 0
    %477 = vmatmul.mubr.bf16.gmra.mrb[0].mxu0 %v316
    %v478 = vpop.f32.mrb[0].mxu0
    %v479 = vadd.f32 %v338, %v478
    %v480 = vpop.f32.mrb[0].mxu0
    %v481 = vpop.f32.mrb[0].mxu0
    %v482 = vadd.f32 %v338, %v481
    %v483 = vpop.f32.mrb[0].mxu0
    %484 = vdwg.mxu0
    %485 = vst [vmem:[#allocation8] sm:$0xff] %v423
    %486 = vst [vmem:[#allocation8 + $0x8] sm:$0xff] %v426
    %487 = vst [vmem:[#allocation8 + $0x10] sm:$0xff] %v431
    %488 = vst [vmem:[#allocation8 + $0x18] sm:$0xff] %v434
    %489 = vst [vmem:[#allocation8 + $0x20] sm:$0xff] %v439
    %490 = vst [vmem:[#allocation8 + $0x28] sm:$0xff] %v442
    %491 = vst [vmem:[#allocation8 + $0x30] sm:$0xff] %v447
    %492 = vst [vmem:[#allocation8 + $0x38] sm:$0xff] %v450
    %493 = vst [vmem:[#allocation8 + $0x40] sm:$0xff] %v455
    %494 = vst [vmem:[#allocation8 + $0x48] sm:$0xff] %v458
    %495 = vst [vmem:[#allocation8 + $0x50] sm:$0xff] %v463
    %496 = vst [vmem:[#allocation8 + $0x58] sm:$0xff] %v466
    %497 = vst [vmem:[#allocation8 + $0x60] sm:$0xff] %v471
    %498 = vst [vmem:[#allocation8 + $0x68] sm:$0xff] %v474
    %499 = vst [vmem:[#allocation8 + $0x70] sm:$0xff] %v479
    %500 = vst [vmem:[#allocation8 + $0x78] sm:$0xff] %v482
    // Predicated region
    $region34: #{tpu_custom_call.1} parent=1 // pred_check
      _
    $region35: #{tpu_custom_call.1} parent=1 // pred_check_branch
      %502 = sbr.rel (0) target = $region37
    $region36: #{tpu_custom_call.1} parent=1 // pred_region
      %s504 = ssub.s32 2048, 2048
      %505 = vsyncadd [#allocation5], %s504
      %s506 = sshll.u32 [#allocation8], 4
      %s507 = int_to_ptr.vmem [resolvable:$true] %s506
      %512 = dma.vmem_to_hbm [thread:$0]  %s507, 2048, %s5, [#allocation5], 128, 128, 8
    $region37: #{tpu_custom_call.1} parent=1 // pred_fallthru
      _
    // Predicated region
    $region38: #{tpu_custom_call.1} parent=1 // pred_check
      _
    $region39: #{tpu_custom_call.1} parent=1 // pred_check_branch
      %514 = sbr.rel (0) target = $region41
    $region40: #{tpu_custom_call.1} parent=1 // pred_region
      %515 = dma.done [#allocation5], 2048
    $region41: #{tpu_custom_call.1} parent=1 // pred_fallthru
      _
    %516 = vsyncpa [#allocation4], 1
    %517 = vsyncpa [#allocation7], 1
    %518 = vsyncpa [#allocation5], 1

</llo_original>
